<compile_context>
chip_gen: v7x
topology: tpu7x:2x2x1
jax: 0.10.0
libtpu: 0.0.40
codegen_flags: <defaults>
</compile_context>

<pallas_src>
import functools

import jax
import jax.numpy as jnp
from jax import lax
from jax.experimental import pallas as pl
from jax.experimental.pallas import tpu as pltpu

_HIDDEN = 64


def _round_up(n, m):
    return ((n + m - 1) // m) * m


def _pick_batch_tile(n_rows, d, itemsize):
    """Largest 128-multiple batch tile whose double-buffered footprint fits ~24 MiB."""
    budget = 24 * 1024 * 1024              # conservative for v7x's 64 MiB VMEM
    per_row = 2 * d * itemsize + 2 * 4     # 2x-buffered x row + 2x-buffered f32 out lane
    tb = budget // max(per_row, 1)
    tb = max(128, min(2048, (tb // 128) * 128))
    tb = min(tb, _round_up(n_rows, 128))   # don't over-allocate for small batches
    return int(tb)


def _net2_mlp_kernel(x_ref, w1_ref, b1_ref, w2r_ref, b2_ref, out_ref):
    # x_ref:   (TB, D)  streamed batch tile (native f32/bf16, no in-kernel upcast)
    # w1_ref:  (D, H)   fc1 weight, (in, out) layout  -> x @ w1
    # b1_ref:  (1, H)
    # w2r_ref: (8, H)   fc2 weight row replicated on 8 sublanes (MXU-aligned M)
    # b2_ref:  (1, 1)
    # out_ref: (1, TB)  lane-dense output row for this batch tile

    # fc1 on the MXU, f32 accumulation.
    h = jnp.dot(x_ref[...], w1_ref[...], preferred_element_type=jnp.float32)
    h = h + b1_ref[...]
    # LeakyReLU(0.2) on the VPU.
    h = jnp.where(h > 0, h, 0.2 * h)

    # fc2: z[t] = sum_j h[t, j] * w2[j].  Computed as (8,H) @ (TB,H)^T so the
    # result comes out of the MXU already lane-dense along the batch tile
    # (no (TB,1) masked stores, no XLU relayout, no degenerate N=1 matmul).
    z = lax.dot_general(
        w2r_ref[...], h,
        dimension_numbers=(((1,), (1,)), ((), ())),
        preferred_element_type=jnp.float32,
    )                                           # (8, TB), rows identical
    out_ref[...] = z[0:1, :] + b2_ref[...]      # (1, TB)


def _forward_dense_ref(x, params):
    """Plain-JAX reference / small-batch fallback (same math)."""
    h = x.astype(jnp.float32) @ params["w1"] + params["b1"]
    h = jnp.where(h > 0, h, 0.2 * h)
    return h @ params["w2"] + params["b2"]


def net2_forward(x, params, start_layer_idx=0, *, use_kernel=None, batch_tile=None):
    """Pallas equivalent of Net2.forward.  Returns {'output': z}."""
    if start_layer_idx >= 2:
        return {"output": x.astype(jnp.float32)}
    if start_layer_idx == 1:
        # TODO(synk): fc2-only path kept in plain JAX (tiny GEMV, no hot loop worth a kernel).
        z = x.astype(jnp.float32) @ params["w2"] + params["b2"]
        return {"output": z}

    # ---- full forward (fc1 -> LeakyReLU -> fc2) ----
    orig_shape = x.shape
    d = orig_shape[-1]
    x2 = x.reshape(-1, d)
    n_rows = x2.shape[0]

    if use_kernel is None:
        # Guard tiny problems: below this the kernel is pure launch/step overhead.
        use_kernel = x2.size >= (1 << 16)
    if not use_kernel:
        z = _forward_dense_ref(x2, params)
        return {"output": z.reshape(orig_shape[:-1] + (1,))}

    # Keep f32 exactly; bf16 inputs are streamed as-is (halves HBM bytes).
    if x2.dtype not in (jnp.float32, jnp.bfloat16):
        x2 = x2.astype(jnp.float32)
    w1 = params["w1"].astype(x2.dtype)                     # (D, H), matches x dtype for MXU
    b1 = params["b1"].reshape(1, _HIDDEN).astype(jnp.float32)
    w2r = jnp.broadcast_to(
        params["w2"].reshape(1, _HIDDEN).astype(jnp.float32), (8, _HIDDEN))
    b2 = params["b2"].reshape(1, 1).astype(jnp.float32)

    tb = _pick_batch_tile(n_rows, d, x2.dtype.itemsize) if batch_tile is None \
        else max(128, _round_up(int(batch_tile), 128))
    nt = pl.cdiv(n_rows, tb)

    z_row = pl.pallas_call(
        _net2_mlp_kernel,
        out_shape=jax.ShapeDtypeStruct((1, nt * tb), jnp.float32),
        grid=(nt,),
        in_specs=[
            pl.BlockSpec((tb, d), lambda i: (i, 0)),        # x tile streams over batch
            pl.BlockSpec((d, _HIDDEN), lambda i: (0, 0)),   # weights stay VMEM-resident
            pl.BlockSpec((1, _HIDDEN), lambda i: (0, 0)),
            pl.BlockSpec((8, _HIDDEN), lambda i: (0, 0)),
            pl.BlockSpec((1, 1), lambda i: (0, 0)),
        ],
        out_specs=pl.BlockSpec((1, tb), lambda i: (0, i)),  # lane-dense output slab
        compiler_params=pltpu.CompilerParams(
            dimension_semantics=("parallel",),              # v7x: shard tiles across 2 TCs
            vmem_limit_bytes=48 * 1024 * 1024,              # above 16/32 MiB scoped defaults
        ),
    )(x2, w1, b1, w2r, b2)

    z = z_row[0, :n_rows].reshape(orig_shape[:-1] + (1,))
    return {"output": z}


def init_net2_params(input_size, key):
    """Deterministic init matching nn.Linear default U(-1/sqrt(fan_in), +1/sqrt(fan_in))."""
    k1, k2, k3, k4 = jax.random.split(key, 4)
    lim1 = 1.0 / jnp.sqrt(jnp.float32(input_size))
    lim2 = 1.0 / jnp.sqrt(jnp.float32(_HIDDEN))
    return {
        "w1": jax.random.uniform(k1, (input_size, _HIDDEN), jnp.float32, -lim1, lim1),
        "b1": jax.random.uniform(k2, (1, _HIDDEN), jnp.float32, -lim1, lim1),
        "w2": jax.random.uniform(k3, (_HIDDEN, 1), jnp.float32, -lim2, lim2),
        "b2": jax.random.uniform(k4, (1, 1), jnp.float32, -lim2, lim2),
    }


if __name__ == "__main__":
    key = jax.random.PRNGKey(0)
    kx, kp = jax.random.split(key)

    # Small demo shapes; batch=300 with a 128-row tile exercises multi-step
    # pipelining plus the ragged last tile (padded rows are sliced off).
    batch, input_size = 300, 32
    x = jax.random.normal(kx, (batch, input_size), jnp.float32)
    params = init_net2_params(input_size, kp)

    fwd = functools.partial(net2_forward, start_layer_idx=0,
                            use_kernel=True, batch_tile=128)
    results = fwd(x, params)
    z = jax.block_until_ready(results["output"])

    # Plain-JAX reference (same math).
    z_ref = _forward_dense_ref(x, params)

    assert z.shape == (batch, 1), z.shape
    assert jnp.allclose(z, z_ref, atol=1e-5, rtol=1e-5), \
        float(jnp.max(jnp.abs(z - z_ref)))

    print("KERNEL_OK")
</pallas_src>

<mosaic_0001>
module attributes {stable_mosaic.version = 11 : i64} {
  func.func @_net2_mlp_kernel(%arg0: i32, %arg1: memref<128x32xf32, #tpu.memory_space<vmem>>, %arg2: memref<32x64xf32, #tpu.memory_space<vmem>>, %arg3: memref<1x64xf32, #tpu.memory_space<vmem>>, %arg4: memref<8x64xf32, #tpu.memory_space<vmem>>, %arg5: memref<1x1xf32, #tpu.memory_space<vmem>>, %arg6: memref<1x128xf32, #tpu.memory_space<vmem>>) attributes {dimension_semantics = [#tpu.dimension_semantics<parallel>], iteration_bounds = array<i64: 3>, scalar_prefetch = 0 : i64, scratch_operands = 0 : i64, tpu.core_type = #tpu.core_type<tc>, window_params = [{transform_indices = @transform_0, window_bounds = array<i64: 128, 32>}, {pipeline_mode = #tpu.pipeline_mode<synchronous>, transform_indices = @transform_1, window_bounds = array<i64: 32, 64>}, {pipeline_mode = #tpu.pipeline_mode<synchronous>, transform_indices = @transform_2, window_bounds = array<i64: 1, 64>}, {pipeline_mode = #tpu.pipeline_mode<synchronous>, transform_indices = @transform_3, window_bounds = array<i64: 8, 64>}, {pipeline_mode = #tpu.pipeline_mode<synchronous>, transform_indices = @transform_4, window_bounds = array<i64: 1, 1>}, {transform_indices = @transform_5, window_bounds = array<i64: 1, 128>}]} {
    %c0 = arith.constant 0 : index
    %c0_0 = arith.constant 0 : index
    %0 = vector.load %arg1[%c0, %c0_0] : memref<128x32xf32, #tpu.memory_space<vmem>>, vector<128x32xf32>
    %c0_1 = arith.constant 0 : index
    %c0_2 = arith.constant 0 : index
    %1 = vector.load %arg2[%c0_1, %c0_2] : memref<32x64xf32, #tpu.memory_space<vmem>>, vector<32x64xf32>
    %cst = arith.constant dense<0.000000e+00> : vector<128x64xf32>
    %2 = tpu.matmul %0, %1, %cst {dimension_numbers = #tpu.dot_dimension_numbers<[1], [0], [0], [1], [0, 0, 1, 1], [], []>} : vector<128x32xf32>, vector<32x64xf32>, vector<128x64xf32> -> vector<128x64xf32>
    %c0_3 = arith.constant 0 : index
    %c0_4 = arith.constant 0 : index
    %3 = vector.load %arg3[%c0_3, %c0_4] : memref<1x64xf32, #tpu.memory_space<vmem>>, vector<1x64xf32>
    %4 = vector.broadcast %3 : vector<1x64xf32> to vector<128x64xf32>
    %5 = arith.addf %2, %4 : vector<128x64xf32>
    %cst_5 = arith.constant 0.000000e+00 : f32
    %6 = vector.broadcast %cst_5 : f32 to vector<128x64xf32>
    %7 = arith.cmpf ogt, %5, %6 : vector<128x64xf32>
    %cst_6 = arith.constant 2.000000e-01 : f32
    %8 = vector.broadcast %cst_6 : f32 to vector<128x64xf32>
    %9 = arith.mulf %8, %5 : vector<128x64xf32>
    %10 = arith.select %7, %5, %9 : vector<128x64xi1>, vector<128x64xf32>
    %c0_7 = arith.constant 0 : index
    %c0_8 = arith.constant 0 : index
    %11 = vector.load %arg4[%c0_7, %c0_8] : memref<8x64xf32, #tpu.memory_space<vmem>>, vector<8x64xf32>
    %cst_9 = arith.constant dense<0.000000e+00> : vector<8x128xf32>
    %12 = tpu.matmul %11, %10, %cst_9 {dimension_numbers = #tpu.dot_dimension_numbers<[1], [1], [0], [0], [0, 0, 1, 0], [], []>} : vector<8x64xf32>, vector<128x64xf32>, vector<8x128xf32> -> vector<8x128xf32>
    %13 = vector.extract_strided_slice %12 {offsets = [0, 0], sizes = [1, 128], strides = [1, 1]} : vector<8x128xf32> to vector<1x128xf32>
    %c0_10 = arith.constant 0 : index
    %c0_11 = arith.constant 0 : index
    %14 = vector.load %arg5[%c0_10, %c0_11] : memref<1x1xf32, #tpu.memory_space<vmem>>, vector<1x1xf32>
    %15 = vector.broadcast %14 : vector<1x1xf32> to vector<1x128xf32>
    %16 = arith.addf %13, %15 : vector<1x128xf32>
    %c0_12 = arith.constant 0 : index
    %c0_13 = arith.constant 0 : index
    %17 = vector.load %arg6[%c0_12, %c0_13] : memref<1x128xf32, #tpu.memory_space<vmem>>, vector<1x128xf32>
    tpu.vector_store %arg6[%c0_12, %c0_13], %16 {strides = array<i32>} : memref<1x128xf32, #tpu.memory_space<vmem>>, vector<1x128xf32>,
    return
  }
  func.func @transform_0(%arg0: i32) -> (i32, i32) {
    %c0_i32 = arith.constant 0 : i32
    %c0_i32_0 = arith.constant 0 : i32
    return %arg0, %c0_i32 : i32, i32
  }
  func.func @transform_1(%arg0: i32) -> (i32, i32) {
    %c0_i32 = arith.constant 0 : i32
    %c0_i32_0 = arith.constant 0 : i32
    %c0_i32_1 = arith.constant 0 : i32
    return %c0_i32, %c0_i32_0 : i32, i32
  }
  func.func @transform_2(%arg0: i32) -> (i32, i32) {
    %c0_i32 = arith.constant 0 : i32
    %c0_i32_0 = arith.constant 0 : i32
    %c0_i32_1 = arith.constant 0 : i32
    return %c0_i32, %c0_i32_0 : i32, i32
  }
  func.func @transform_3(%arg0: i32) -> (i32, i32) {
    %c0_i32 = arith.constant 0 : i32
    %c0_i32_0 = arith.constant 0 : i32
    %c0_i32_1 = arith.constant 0 : i32
    return %c0_i32, %c0_i32_0 : i32, i32
  }
  func.func @transform_4(%arg0: i32) -> (i32, i32) {
    %c0_i32 = arith.constant 0 : i32
    %c0_i32_0 = arith.constant 0 : i32
    %c0_i32_1 = arith.constant 0 : i32
    return %c0_i32, %c0_i32_0 : i32, i32
  }
  func.func @transform_5(%arg0: i32) -> (i32, i32) {
    %c0_i32 = arith.constant 0 : i32
    %c0_i32_0 = arith.constant 0 : i32
    return %c0_i32, %arg0 : i32, i32
  }
}

</mosaic_0001>

<llo_original>
// kernel: tpu_custom_call.1
$region0: #{tpu_custom_call.1}
  #allocation0 [shape = 'u32[]', space=smem, size = 0x4, offset = 0x4, fixed_abs, tag = 'smem constant byte address 0x4 - core index']
  #allocation1 [shape = 'u32[144,128]{1,0:T(1,128)}', space=vmem, size = 0x12000, scoped, tag = 'internal scratch']
  #allocation2 [shape = 'f32[1,1]{1,0:T(1,128)S(1)}', space=vmem, size = 0x200, scoped, tag = 'scoped memory for tpu_custom_call.1']
  %s0 = inlined_call_operand.vmem [shape: f32[300,32], index: 0, kind: input, shape index: {}]
  %s1 = inlined_call_operand.vmem [shape: f32[32,64], index: 1, kind: input, shape index: {}]
  %s2 = inlined_call_operand.vmem [shape: f32[1,64], index: 2, kind: input, shape index: {}]
  %s3 = inlined_call_operand.vmem [shape: f32[8,64], index: 3, kind: input, shape index: {}]
  %s4 = inlined_call_operand.<no memory space> [shape: f32[1,1], index: 4, kind: input, shape index: {}]
  %s5 = inlined_call_operand.hbm [shape: f32[1,384], index: 5, kind: output, shape index: {}]
  %s6 = sld [smem:[#allocation0]]
  $region53: #{tpu_custom_call.1} parent=0
    _
  %s8 = ssub.s32 1, %s6
  %s9 = scalar_select 0, %s8, %s6
  %v10 = vstv %s4
  %11 = vst [vmem:[#allocation2] sm:$0x1] %v10
  $region1: #{tpu_custom_call.1} parent=0
    #allocation3 [shape = 'u8[1024]{0}', space=vmem, size = 0x400, scoped, tag = 'output window, operand 0']
    #allocation4 [shape = 's32[2]{0}', space=sflag, size = 0x8, scoped, tag = 'scoped memory for tpu_custom_call.1']
    %12 = vsyncpa [#allocation4], 0
    %s13 = scalar_lea.sflag [#allocation4], 1
    %14 = vsyncpa %s13, 0
    loop: start=0, step=1, limit=5
    $region2: #{tpu_custom_call.1} parent=1 // loop_pre_header
      _
    $region3: #{tpu_custom_call.1} parent=1 // loop_header
      %s16 = sphi 0, %s20
      %p17 = scmp.ge.s32.totalorder %s16, 5
      %s26 = sphi 0, %s28
      %s29 = sphi 0, %s26
      %s30 = sphi 0, %s29
      %s46 = sphi 0, %s30
      %s50 = sphi 0, %s50
      %s52 = sphi 0, %s50
      %s53 = sphi 0, %s52
      %s67 = sphi 0, %s53
      %s71 = sphi 0, %s71
      %s73 = sphi 0, %s71
      %s74 = sphi 0, %s73
      %s88 = sphi 0, %s74
      %s92 = sphi 0, %s92
      %s94 = sphi 0, %s92
      %s95 = sphi 0, %s94
      %s109 = sphi 0, %s95
      %s113 = sphi 0, %s113
      %s115 = sphi 0, %s113
      %s116 = sphi 0, %s115
      %s130 = sphi 0, %s116
      %s136 = sphi 0, %s138
      %s139 = sphi 0, %s136
      %s140 = sphi 0, %s139
      %s156 = sphi 0, %s140
    $region4: #{tpu_custom_call.1} parent=1 // loop_header_branch
      %19 = sbr.rel (%p17) target = $region8
    $region5: #{tpu_custom_call.1} parent=1 // loop_body
      %s21 = ssub.s32 %s16, 1
      %s22 = ssub.s32 %s16, 2
      %s23 = sadd.s32 %s16, 1
      %s24 = ssub.s32 %s16, %s23
      %p25 = scmp.eq.s32.totalorder %s24, 0
      %s27 = sadd.s32 %s26, 1
      %s28 = scalar_select %p25, %s26, %s27
      %p31 = pneg %p25
      %p32 = scmp.eq.s32.totalorder %s16, 2
      %p33 = por %p31, %p32
      %p34 = scmp.ne.s32.totalorder %s26, %s29
      %p35 = scmp.eq.s32.totalorder %s16, 0
      %p36 = por %p34, %p35
      %p37 = scmp.ne.s32.totalorder %s26, %s29
      %p38 = scmp.eq.s32.totalorder %s21, 2
      %p39 = por %p37, %p38
      %p40 = scmp.ne.s32.totalorder %s29, %s30
      %p41 = scmp.eq.s32.totalorder %s21, 0
      %p42 = por %p40, %p41
      %p43 = scmp.ne.s32.totalorder %s29, %s30
      %p44 = scmp.eq.s32.totalorder %s22, 2
      %p45 = por %p43, %p44
      %p47 = scmp.ne.s32.totalorder %s30, %s46
      %p48 = scmp.eq.s32.totalorder %s22, 0
      %p49 = por %p47, %p48
      %s51 = sadd.s32 %s50, 1
      %p54 = scmp.eq.s32.totalorder %s16, 2
      %p55 = scmp.ne.s32.totalorder %s50, %s52
      %p56 = scmp.eq.s32.totalorder %s16, 0
      %p57 = por %p55, %p56
      %p58 = scmp.ne.s32.totalorder %s50, %s52
      %p59 = scmp.eq.s32.totalorder %s21, 2
      %p60 = por %p58, %p59
      %p61 = scmp.ne.s32.totalorder %s52, %s53
      %p62 = scmp.eq.s32.totalorder %s21, 0
      %p63 = por %p61, %p62
      %p64 = scmp.ne.s32.totalorder %s52, %s53
      %p65 = scmp.eq.s32.totalorder %s22, 2
      %p66 = por %p64, %p65
      %p68 = scmp.ne.s32.totalorder %s53, %s67
      %p69 = scmp.eq.s32.totalorder %s22, 0
      %p70 = por %p68, %p69
      %s72 = sadd.s32 %s71, 1
      %p75 = scmp.eq.s32.totalorder %s16, 2
      %p76 = scmp.ne.s32.totalorder %s71, %s73
      %p77 = scmp.eq.s32.totalorder %s16, 0
      %p78 = por %p76, %p77
      %p79 = scmp.ne.s32.totalorder %s71, %s73
      %p80 = scmp.eq.s32.totalorder %s21, 2
      %p81 = por %p79, %p80
      %p82 = scmp.ne.s32.totalorder %s73, %s74
      %p83 = scmp.eq.s32.totalorder %s21, 0
      %p84 = por %p82, %p83
      %p85 = scmp.ne.s32.totalorder %s73, %s74
      %p86 = scmp.eq.s32.totalorder %s22, 2
      %p87 = por %p85, %p86
      %p89 = scmp.ne.s32.totalorder %s74, %s88
      %p90 = scmp.eq.s32.totalorder %s22, 0
      %p91 = por %p89, %p90
      %s93 = sadd.s32 %s92, 1
      %p96 = scmp.eq.s32.totalorder %s16, 2
      %p97 = scmp.ne.s32.totalorder %s92, %s94
      %p98 = scmp.eq.s32.totalorder %s16, 0
      %p99 = por %p97, %p98
      %p100 = scmp.ne.s32.totalorder %s92, %s94
      %p101 = scmp.eq.s32.totalorder %s21, 2
      %p102 = por %p100, %p101
      %p103 = scmp.ne.s32.totalorder %s94, %s95
      %p104 = scmp.eq.s32.totalorder %s21, 0
      %p105 = por %p103, %p104
      %p106 = scmp.ne.s32.totalorder %s94, %s95
      %p107 = scmp.eq.s32.totalorder %s22, 2
      %p108 = por %p106, %p107
      %p110 = scmp.ne.s32.totalorder %s95, %s109
      %p111 = scmp.eq.s32.totalorder %s22, 0
      %p112 = por %p110, %p111
      %s114 = sadd.s32 %s113, 1
      %p117 = scmp.eq.s32.totalorder %s16, 2
      %p118 = scmp.ne.s32.totalorder %s113, %s115
      %p119 = scmp.eq.s32.totalorder %s16, 0
      %p120 = por %p118, %p119
      %p121 = scmp.ne.s32.totalorder %s113, %s115
      %p122 = scmp.eq.s32.totalorder %s21, 2
      %p123 = por %p121, %p122
      %p124 = scmp.ne.s32.totalorder %s115, %s116
      %p125 = scmp.eq.s32.totalorder %s21, 0
      %p126 = por %p124, %p125
      %p127 = scmp.ne.s32.totalorder %s115, %s116
      %p128 = scmp.eq.s32.totalorder %s22, 2
      %p129 = por %p127, %p128
      %p131 = scmp.ne.s32.totalorder %s116, %s130
      %p132 = scmp.eq.s32.totalorder %s22, 0
      %p133 = por %p131, %p132
      %s134 = ssub.s32 %s16, %s23
      %p135 = scmp.eq.s32.totalorder %s134, 0
      %s137 = sadd.s32 %s136, 1
      %s138 = scalar_select %p135, %s136, %s137
      %p141 = pneg %p135
      %p142 = scmp.eq.s32.totalorder %s16, 2
      %p143 = por %p141, %p142
      %p144 = scmp.ne.s32.totalorder %s136, %s139
      %p145 = scmp.eq.s32.totalorder %s16, 0
      %p146 = por %p144, %p145
      %p147 = scmp.ne.s32.totalorder %s136, %s139
      %p148 = scmp.eq.s32.totalorder %s21, 2
      %p149 = por %p147, %p148
      %p150 = scmp.ne.s32.totalorder %s139, %s140
      %p151 = scmp.eq.s32.totalorder %s21, 0
      %p152 = por %p150, %p151
      %p153 = scmp.ne.s32.totalorder %s139, %s140
      %p154 = scmp.eq.s32.totalorder %s22, 2
      %p155 = por %p153, %p154
      %p157 = scmp.ne.s32.totalorder %s140, %s156
      %p158 = scmp.eq.s32.totalorder %s22, 0
      %p159 = por %p157, %p158
      %p160 = scmp.le.s32.totalorder 1, %s16
      %p161 = scmp.lt.s32.totalorder %s16, 4
      %p162 = pnand %p160, %p161
      %p163 = pneg %p162
      // Predicated region
      $region9: #{tpu_custom_call.1} parent=5 // pred_check
        _
      $region10: #{tpu_custom_call.1} parent=5 // pred_check_branch
        %165 = sbr.rel (%p162) target = $region12
      $region11: #{tpu_custom_call.1} parent=5 // pred_region
        %s166 = ssub.s32 %s16, 1
        // Predicated region
        $region13: #{tpu_custom_call.1} parent=11 // pred_check
          %p167 = pneg %p63
        $region14: #{tpu_custom_call.1} parent=11 // pred_check_branch
          %169 = sbr.rel (%p167) target = $region16
        $region15: #{tpu_custom_call.1} parent=11 // pred_region
          _
        $region16: #{tpu_custom_call.1} parent=11 // pred_fallthru
          _
        // Predicated region
        $region17: #{tpu_custom_call.1} parent=11 // pred_check
          %p170 = pneg %p84
        $region18: #{tpu_custom_call.1} parent=11 // pred_check_branch
          %172 = sbr.rel (%p170) target = $region20
        $region19: #{tpu_custom_call.1} parent=11 // pred_region
          _
        $region20: #{tpu_custom_call.1} parent=11 // pred_fallthru
          _
        // Predicated region
        $region21: #{tpu_custom_call.1} parent=11 // pred_check
          %p173 = pneg %p105
        $region22: #{tpu_custom_call.1} parent=11 // pred_check_branch
          %175 = sbr.rel (%p173) target = $region24
        $region23: #{tpu_custom_call.1} parent=11 // pred_region
          _
        $region24: #{tpu_custom_call.1} parent=11 // pred_fallthru
          _
        // Predicated region
        $region25: #{tpu_custom_call.1} parent=11 // pred_check
          %p176 = pneg %p126
        $region26: #{tpu_custom_call.1} parent=11 // pred_check_branch
          %178 = sbr.rel (%p176) target = $region28
        $region27: #{tpu_custom_call.1} parent=11 // pred_region
          _
        $region28: #{tpu_custom_call.1} parent=11 // pred_fallthru
          _
      $region12: #{tpu_custom_call.1} parent=5 // pred_fallthru
        _
      %p179 = scmp.lt.s32.totalorder %s16, 3
      // Predicated region
      $region29: #{tpu_custom_call.1} parent=5 // pred_check
        %p180 = pneg %p179
      $region30: #{tpu_custom_call.1} parent=5 // pred_check_branch
        %182 = sbr.rel (%p180) target = $region32
      $region31: #{tpu_custom_call.1} parent=5 // pred_region
        // Predicated region
        $region33: #{tpu_custom_call.1} parent=31 // pred_check
          %p183 = pneg %p36
        $region34: #{tpu_custom_call.1} parent=31 // pred_check_branch
          %185 = sbr.rel (%p183) target = $region36
        $region35: #{tpu_custom_call.1} parent=31 // pred_region
          %s186 = smul.u32 16, %s16
          %s187 = ssub.s32 38, %s186
          %p188 = scmp.lt.s32.totalorder %s187, 16
          %s189 = scalar_select %p188, %s187, 16
          %s190 = smul.u32 128, %s189
          %p191 = scmp.lt.s32.totalorder %s186, 37
          %s192 = scalar_select %p191, %s186, 37
          %s193 = smul.addr %s192, 8
          %s194 = scalar_lea.vmem %s0, %s193
          %s195 = smul.u32 16, %s16
          %s196 = ssub.s32 38, %s195
          %p197 = scmp.lt.s32.totalorder %s196, 16
          %s198 = scalar_select %p197, %s196, 16
          %s199 = smul.u32 128, %s198
        $region36: #{tpu_custom_call.1} parent=31 // pred_fallthru
          _
      $region32: #{tpu_custom_call.1} parent=5 // pred_fallthru
        _
      %p200 = scmp.le.s32.totalorder 1, %s16
      %p201 = scmp.lt.s32.totalorder %s16, 4
      %p202 = pnand %p200, %p201
      %p203 = pneg %p202
      // Predicated region
      $region37: #{tpu_custom_call.1} parent=5 // pred_check
        _
      $region38: #{tpu_custom_call.1} parent=5 // pred_check_branch
        %205 = sbr.rel (%p202) target = $region40
      $region39: #{tpu_custom_call.1} parent=5 // pred_region
        %s206 = ssub.s32 %s16, 1
        %s207 = smul.u32 16, %s21
        %s208 = ssub.s32 38, %s207
        %p209 = scmp.lt.s32.totalorder %s208, 16
        %s210 = scalar_select %p209, %s208, 16
        %s211 = smul.u32 128, %s210
        %p212 = scmp.lt.s32.totalorder %s207, 37
        %s213 = scalar_select %p212, %s207, 37
        %s214 = smul.addr %s213, 8
        %s215 = scalar_lea.vmem %s0, %s214
        %p216 = pneg %p42
        %p217 = pneg %p39
        %p218 = pneg %p63
        %p219 = pneg %p60
        %p220 = pneg %p84
        %p221 = pneg %p81
        %p222 = pneg %p105
        %p223 = pneg %p102
        %p224 = pneg %p126
        %p225 = pneg %p123
        %p226 = pneg %p152
        %p227 = pneg %p149
        %s228 = sand.u32 %s139, 1
        %s229 = scalar_lea.sflag [#allocation4], %s228
        %s230 = sand.u32 %s139, 1
        %s231 = scalar_lea.vmem [#allocation3], %s230
        %s232 = smul.u32 16, %s21
        %s233 = ssub.s32 38, %s232
        %p234 = scmp.lt.s32.totalorder %s233, 16
        %s235 = scalar_select %p234, %s233, 16
        %s236 = smul.u32 128, %s235
        %p237 = scmp.lt.s32.totalorder %s232, 37
        %s238 = scalar_select %p237, %s232, 37
        %s239 = smul.addr %s238, 8
        %s240 = scalar_lea.vmem %s0, %s239
        %s241 = smul.u32 16, %s21
        %s242 = ssub.s32 38, %s241
        %p243 = scmp.lt.s32.totalorder %s242, 16
        %s244 = scalar_select %p243, %s242, 16
        %s245 = smul.u32 128, %s244
        %v246 = vld [vmem:[%s240] sm:$0xff]
        %v247 = vld [vmem:[%s240 + $0x8] sm:$0xff]
        %v248 = vld [vmem:[%s240 + $0x10] sm:$0xff]
        %v249 = vld [vmem:[%s240 + $0x18] sm:$0xff]
        %v250 = vld [vmem:[%s240 + $0x20] sm:$0xff]
        %v251 = vld [vmem:[%s240 + $0x28] sm:$0xff]
        %v252 = vld [vmem:[%s240 + $0x30] sm:$0xff]
        %v253 = vld [vmem:[%s240 + $0x38] sm:$0xff]
        %v254 = vld [vmem:[%s240 + $0x40] sm:$0xff]
        %v255 = vld [vmem:[%s240 + $0x48] sm:$0xff]
        %v256 = vld [vmem:[%s240 + $0x50] sm:$0xff]
        %v257 = vld [vmem:[%s240 + $0x58] sm:$0xff]
        %v258 = vld [vmem:[%s240 + $0x60] sm:$0xff]
        %v259 = vld [vmem:[%s240 + $0x68] sm:$0xff]
        %v260 = vld [vmem:[%s240 + $0x70] sm:$0xff]
        %v261 = vld [vmem:[%s240 + $0x78] sm:$0xff]
        %v262 = vld [vmem:[%s1] sm:$0xff]
        %v263 = vld [vmem:[%s1 + $0x8] sm:$0xff]
        %v264 = vld [vmem:[%s1 + $0x10] sm:$0xff]
        %v265 = vld [vmem:[%s1 + $0x18] sm:$0xff]
        %v266 = vld [vmem:[%s2] sm:$0x1]
        %v268 = vlaneseq
        %v269 = vshrl.u32 %v268, 7
        %v270 = vsub.s32 0, %v269
        %v271 = vrot.slane %v266, %v270
        %vm273 = vcmask 261120
        %v275 = vsel %vm273, %v246, 0
        %v278 = vsel %vm273, %v247, 0
        %v281 = vsel %vm273, %v248, 0
        %v284 = vsel %vm273, %v249, 0
        %v287 = vsel %vm273, %v250, 0
        %v290 = vsel %vm273, %v251, 0
        %v293 = vsel %vm273, %v252, 0
        %v296 = vsel %vm273, %v253, 0
        %v299 = vsel %vm273, %v254, 0
        %v302 = vsel %vm273, %v255, 0
        %v305 = vsel %vm273, %v256, 0
        %v308 = vsel %vm273, %v257, 0
        %v311 = vsel %vm273, %v258, 0
        %v314 = vsel %vm273, %v259, 0
        %v317 = vsel %vm273, %v260, 0
        %v320 = vsel %vm273, %v261, 0
        %322 = vmatprep.subr.mxu0 0.0
        %323 = vmatpush1.msra.mxu0 %v262
        %324 = vmatprep.subr.mxu0 0.0
        %325 = vmatpush1.msra.mxu0 %v263
        %326 = vmatprep.subr.mxu0 0.0
        %327 = vmatpush1.msra.mxu0 %v264
        %328 = vmatprep.subr.mxu0 0.0
        %329 = vmatpush1.msra.mxu0 %v265
        %330 = vmatprep.subr.mxu0 0.0
        %331 = vmatpush1.msra.mxu0 0.0
        %332 = vmatprep.subr.mxu0 0.0
        %333 = vmatpush1.msra.mxu0 0.0
        %334 = vmatprep.subr.mxu0 0.0
        %335 = vmatpush1.msra.mxu0 0.0
        %336 = vmatprep.subr.mxu0 0.0
        %337 = vmatpush1.msra.mxu0 0.0
        %338 = vmatprep.subr.mxu0 0.0
        %339 = vmatpush1.msra.mxu0 0.0
        %340 = vmatprep.subr.mxu0 0.0
        %341 = vmatpush1.msra.mxu0 0.0
        %342 = vmatprep.subr.mxu0 0.0
        %343 = vmatpush1.msra.mxu0 0.0
        %344 = vmatprep.subr.mxu0 0.0
        %345 = vmatpush1.msra.mxu0 0.0
        %346 = vmatprep.subr.mxu0 0.0
        %347 = vmatpush1.msra.mxu0 0.0
        %348 = vmatprep.subr.mxu0 0.0
        %349 = vmatpush1.msra.mxu0 0.0
        %350 = vmatprep.subr.mxu0 0.0
        %351 = vmatpush1.msra.mxu0 0.0
        %352 = vmatprep.subr.mxu0 0.0
        %353 = vmatpush1.msra.mxu0 0.0
        %354 = vmatprep.subr.mxu0 0.0
        %355 = vmatpush1.msra.mxu0 0.0
        %356 = vmatprep.subr.mxu0 0.0
        %357 = vmatpush1.msra.mxu0 0.0
        %358 = vmatprep.subr.mxu0 0.0
        %359 = vmatpush1.msra.mxu0 0.0
        %360 = vmatprep.subr.mxu0 0.0
        %361 = vmatpush1.msra.mxu0 0.0
        %362 = vmatprep.subr.mxu0 0.0
        %363 = vmatpush1.msra.mxu0 0.0
        %364 = vmatprep.subr.mxu0 0.0
        %365 = vmatpush1.msra.mxu0 0.0
        %366 = vmatprep.subr.mxu0 0.0
        %367 = vmatpush1.msra.mxu0 0.0
        %368 = vmatprep.subr.mxu0 0.0
        %369 = vmatpush1.msra.mxu0 0.0
        %370 = vmatprep.subr.mxu0 0.0
        %371 = vmatpush1.msra.mxu0 0.0
        %372 = vmatprep.subr.mxu0 0.0
        %373 = vmatpush1.msra.mxu0 0.0
        %374 = vmatprep.subr.mxu0 0.0
        %375 = vmatpush1.msra.mxu0 0.0
        %376 = vmatprep.subr.mxu0 0.0
        %377 = vmatpush1.msra.mxu0 0.0
        %378 = vmatprep.subr.mxu0 0.0
        %379 = vmatpush1.msra.mxu0 0.0
        %380 = vmatprep.subr.mxu0 0.0
        %381 = vmatpush1.msra.mxu0 0.0
        %382 = vmatprep.subr.mxu0 0.0
        %383 = vmatpush1.msra.mxu0 0.0
        %384 = vmatprep.subr.mxu0 0.0
        %385 = vmatpush1.msra.mxu0 0.0
        %386 = vmatprep.mubr.f32.mxu0 0.0
        %387 = vmatmul.mubr.f32.gmra.mrb[0].mxu0 %v275
        %v388 = vpop.f32.mrb[0].mxu0
        %v389 = vadd.f32 %v271, %v388
        %v390 = vpop.f32.mrb[0].mxu0
        %391 = vmatprep.mubr.f32.mxu0 0.0
        %392 = vmatmul.mubr.f32.gmra.mrb[0].mxu0 %v278
        %v393 = vpop.f32.mrb[0].mxu0
        %v394 = vadd.f32 %v271, %v393
        %v395 = vpop.f32.mrb[0].mxu0
        %396 = vmatprep.mubr.f32.mxu0 0.0
        %397 = vmatmul.mubr.f32.gmra.mrb[0].mxu0 %v281
        %v398 = vpop.f32.mrb[0].mxu0
        %v399 = vadd.f32 %v271, %v398
        %v400 = vpop.f32.mrb[0].mxu0
        %401 = vmatprep.mubr.f32.mxu0 0.0
        %402 = vmatmul.mubr.f32.gmra.mrb[0].mxu0 %v284
        %v403 = vpop.f32.mrb[0].mxu0
        %v404 = vadd.f32 %v271, %v403
        %v405 = vpop.f32.mrb[0].mxu0
        %406 = vmatprep.mubr.f32.mxu0 0.0
        %407 = vmatmul.mubr.f32.gmra.mrb[0].mxu0 %v287
        %v408 = vpop.f32.mrb[0].mxu0
        %v409 = vadd.f32 %v271, %v408
        %v410 = vpop.f32.mrb[0].mxu0
        %411 = vmatprep.mubr.f32.mxu0 0.0
        %412 = vmatmul.mubr.f32.gmra.mrb[0].mxu0 %v290
        %v413 = vpop.f32.mrb[0].mxu0
        %v414 = vadd.f32 %v271, %v413
        %v415 = vpop.f32.mrb[0].mxu0
        %416 = vmatprep.mubr.f32.mxu0 0.0
        %417 = vmatmul.mubr.f32.gmra.mrb[0].mxu0 %v293
        %v418 = vpop.f32.mrb[0].mxu0
        %v419 = vadd.f32 %v271, %v418
        %v420 = vpop.f32.mrb[0].mxu0
        %421 = vmatprep.mubr.f32.mxu0 0.0
        %422 = vmatmul.mubr.f32.gmra.mrb[0].mxu0 %v296
        %v423 = vpop.f32.mrb[0].mxu0
        %v424 = vadd.f32 %v271, %v423
        %v425 = vpop.f32.mrb[0].mxu0
        %426 = vmatprep.mubr.f32.mxu0 0.0
        %427 = vmatmul.mubr.f32.gmra.mrb[0].mxu0 %v299
        %v428 = vpop.f32.mrb[0].mxu0
        %v429 = vadd.f32 %v271, %v428
        %v430 = vpop.f32.mrb[0].mxu0
        %431 = vmatprep.mubr.f32.mxu0 0.0
        %432 = vmatmul.mubr.f32.gmra.mrb[0].mxu0 %v302
        %v433 = vpop.f32.mrb[0].mxu0
        %v434 = vadd.f32 %v271, %v433
        %v435 = vpop.f32.mrb[0].mxu0
        %436 = vmatprep.mubr.f32.mxu0 0.0
        %437 = vmatmul.mubr.f32.gmra.mrb[0].mxu0 %v305
        %v438 = vpop.f32.mrb[0].mxu0
        %v439 = vadd.f32 %v271, %v438
        %v440 = vpop.f32.mrb[0].mxu0
        %441 = vmatprep.mubr.f32.mxu0 0.0
        %442 = vmatmul.mubr.f32.gmra.mrb[0].mxu0 %v308
        %v443 = vpop.f32.mrb[0].mxu0
        %v444 = vadd.f32 %v271, %v443
        %v445 = vpop.f32.mrb[0].mxu0
        %446 = vmatprep.mubr.f32.mxu0 0.0
        %447 = vmatmul.mubr.f32.gmra.mrb[0].mxu0 %v311
        %v448 = vpop.f32.mrb[0].mxu0
        %v449 = vadd.f32 %v271, %v448
        %v450 = vpop.f32.mrb[0].mxu0
        %451 = vmatprep.mubr.f32.mxu0 0.0
        %452 = vmatmul.mubr.f32.gmra.mrb[0].mxu0 %v314
        %v453 = vpop.f32.mrb[0].mxu0
        %v454 = vadd.f32 %v271, %v453
        %v455 = vpop.f32.mrb[0].mxu0
        %456 = vmatprep.mubr.f32.mxu0 0.0
        %457 = vmatmul.mubr.f32.gmra.mrb[0].mxu0 %v317
        %v458 = vpop.f32.mrb[0].mxu0
        %v459 = vadd.f32 %v271, %v458
        %v460 = vpop.f32.mrb[0].mxu0
        %461 = vmatprep.mubr.f32.mxu0 0.0
        %462 = vmatmul.mubr.f32.gmra.mrb[0].mxu0 %v320
        %v463 = vpop.f32.mrb[0].mxu0
        %v464 = vadd.f32 %v271, %v463
        %v465 = vpop.f32.mrb[0].mxu0
        %466 = vdwg.mxu0
        %vm467 = vcmp.gt.f32.partialorder %v389, 0.0
        %vm468 = vcmp.gt.f32.partialorder %v394, 0.0
        %vm469 = vcmp.gt.f32.partialorder %v399, 0.0
        %vm470 = vcmp.gt.f32.partialorder %v404, 0.0
        %vm471 = vcmp.gt.f32.partialorder %v409, 0.0
        %vm472 = vcmp.gt.f32.partialorder %v414, 0.0
        %vm473 = vcmp.gt.f32.partialorder %v419, 0.0
        %vm474 = vcmp.gt.f32.partialorder %v424, 0.0
        %vm475 = vcmp.gt.f32.partialorder %v429, 0.0
        %vm476 = vcmp.gt.f32.partialorder %v434, 0.0
        %vm477 = vcmp.gt.f32.partialorder %v439, 0.0
        %vm478 = vcmp.gt.f32.partialorder %v444, 0.0
        %vm479 = vcmp.gt.f32.partialorder %v449, 0.0
        %vm480 = vcmp.gt.f32.partialorder %v454, 0.0
        %vm481 = vcmp.gt.f32.partialorder %v459, 0.0
        %vm482 = vcmp.gt.f32.partialorder %v464, 0.0
        %v483 = vmul.f32 %v389, 0.2
        %v484 = vmul.f32 %v394, 0.2
        %v485 = vmul.f32 %v399, 0.2
        %v486 = vmul.f32 %v404, 0.2
        %v487 = vmul.f32 %v409, 0.2
        %v488 = vmul.f32 %v414, 0.2
        %v489 = vmul.f32 %v419, 0.2
        %v490 = vmul.f32 %v424, 0.2
        %v491 = vmul.f32 %v429, 0.2
        %v492 = vmul.f32 %v434, 0.2
        %v493 = vmul.f32 %v439, 0.2
        %v494 = vmul.f32 %v444, 0.2
        %v495 = vmul.f32 %v449, 0.2
        %v496 = vmul.f32 %v454, 0.2
        %v497 = vmul.f32 %v459, 0.2
        %v498 = vmul.f32 %v464, 0.2
        %v499 = vsel %vm467, %v389, %v483
        %v500 = vsel %vm468, %v394, %v484
        %v501 = vsel %vm469, %v399, %v485
        %v502 = vsel %vm470, %v404, %v486
        %v503 = vsel %vm471, %v409, %v487
        %v504 = vsel %vm472, %v414, %v488
        %v505 = vsel %vm473, %v419, %v489
        %v506 = vsel %vm474, %v424, %v490
        %v507 = vsel %vm475, %v429, %v491
        %v508 = vsel %vm476, %v434, %v492
        %v509 = vsel %vm477, %v439, %v493
        %v510 = vsel %vm478, %v444, %v494
        %v511 = vsel %vm479, %v449, %v495
        %v512 = vsel %vm480, %v454, %v496
        %v513 = vsel %vm481, %v459, %v497
        %v514 = vsel %vm482, %v464, %v498
        %v515 = vld [vmem:[%s3] sm:$0xff]
        %vm516 = vcmask 523264
        %v518 = vsel %vm516, %v515, 0
        %v521 = vsel %vm516, %v499, 0
        %v524 = vsel %vm516, %v500, 0
        %v527 = vsel %vm516, %v501, 0
        %v530 = vsel %vm516, %v502, 0
        %v533 = vsel %vm516, %v503, 0
        %v536 = vsel %vm516, %v504, 0
        %v539 = vsel %vm516, %v505, 0
        %v542 = vsel %vm516, %v506, 0
        %v545 = vsel %vm516, %v507, 0
        %v548 = vsel %vm516, %v508, 0
        %v551 = vsel %vm516, %v509, 0
        %v554 = vsel %vm516, %v510, 0
        %v557 = vsel %vm516, %v511, 0
        %v560 = vsel %vm516, %v512, 0
        %v563 = vsel %vm516, %v513, 0
        %v566 = vsel %vm516, %v514, 0
        %568 = vmatprep.subr.mxu0 0.0
        %569 = vmatpush1.xpose.msra.mxu0 %v521
        %570 = vmatprep.subr.mxu0 0.0
        %571 = vmatpush1.xpose.msra.mxu0 %v524
        %572 = vmatprep.subr.mxu0 0.0
        %573 = vmatpush1.xpose.msra.mxu0 %v527
        %574 = vmatprep.subr.mxu0 0.0
        %575 = vmatpush1.xpose.msra.mxu0 %v530
        %576 = vmatprep.subr.mxu0 0.0
        %577 = vmatpush1.xpose.msra.mxu0 %v533
        %578 = vmatprep.subr.mxu0 0.0
        %579 = vmatpush1.xpose.msra.mxu0 %v536
        %580 = vmatprep.subr.mxu0 0.0
        %581 = vmatpush1.xpose.msra.mxu0 %v539
        %582 = vmatprep.subr.mxu0 0.0
        %583 = vmatpush1.xpose.msra.mxu0 %v542
        %584 = vmatprep.subr.mxu0 0.0
        %585 = vmatpush1.xpose.msra.mxu0 %v545
        %586 = vmatprep.subr.mxu0 0.0
        %587 = vmatpush1.xpose.msra.mxu0 %v548
        %588 = vmatprep.subr.mxu0 0.0
        %589 = vmatpush1.xpose.msra.mxu0 %v551
        %590 = vmatprep.subr.mxu0 0.0
        %591 = vmatpush1.xpose.msra.mxu0 %v554
        %592 = vmatprep.subr.mxu0 0.0
        %593 = vmatpush1.xpose.msra.mxu0 %v557
        %594 = vmatprep.subr.mxu0 0.0
        %595 = vmatpush1.xpose.msra.mxu0 %v560
        %596 = vmatprep.subr.mxu0 0.0
        %597 = vmatpush1.xpose.msra.mxu0 %v563
        %598 = vmatprep.subr.mxu0 0.0
        %599 = vmatpush1.xpose.msra.mxu0 %v566
        %600 = vmatprep.subr.mxu0 0.0
        %601 = vmatpush1.xpose.msra.mxu0 0.0
        %602 = vmatprep.subr.mxu0 0.0
        %603 = vmatpush1.xpose.msra.mxu0 0.0
        %604 = vmatprep.subr.mxu0 0.0
        %605 = vmatpush1.xpose.msra.mxu0 0.0
        %606 = vmatprep.subr.mxu0 0.0
        %607 = vmatpush1.xpose.msra.mxu0 0.0
        %608 = vmatprep.subr.mxu0 0.0
        %609 = vmatpush1.xpose.msra.mxu0 0.0
        %610 = vmatprep.subr.mxu0 0.0
        %611 = vmatpush1.xpose.msra.mxu0 0.0
        %612 = vmatprep.subr.mxu0 0.0
        %613 = vmatpush1.xpose.msra.mxu0 0.0
        %614 = vmatprep.subr.mxu0 0.0
        %615 = vmatpush1.xpose.msra.mxu0 0.0
        %616 = vmatprep.subr.mxu0 0.0
        %617 = vmatpush1.xpose.msra.mxu0 0.0
        %618 = vmatprep.subr.mxu0 0.0
        %619 = vmatpush1.xpose.msra.mxu0 0.0
        %620 = vmatprep.subr.mxu0 0.0
        %621 = vmatpush1.xpose.msra.mxu0 0.0
        %622 = vmatprep.subr.mxu0 0.0
        %623 = vmatpush1.xpose.msra.mxu0 0.0
        %624 = vmatprep.subr.mxu0 0.0
        %625 = vmatpush1.xpose.msra.mxu0 0.0
        %626 = vmatprep.subr.mxu0 0.0
        %627 = vmatpush1.xpose.msra.mxu0 0.0
        %628 = vmatprep.subr.mxu0 0.0
        %629 = vmatpush1.xpose.msra.mxu0 0.0
        %630 = vmatprep.subr.mxu0 0.0
        %631 = vmatpush1.xpose.msra.mxu0 0.0
        %632 = vmatprep.mubr.f32.mxu0 0.0
        %633 = vmatmul.mubr.f32.gmra.mrb[0].mxu0 %v518
        %v634 = vpop.f32.mrb[0].mxu0
        %v635 = vadd.f32 0.0, %v634
        %v636 = vpop.f32.mrb[0].mxu0
        %637 = vdwg.mxu0
        %v638 = vld [vmem:[#allocation2] sm:$0x1]
        %640 = vset.pattern.permute.xlu0 0
        %641 = vperm.xlu0 %640, %v638
        %v642 = vpop.permute.xlu0 %641
        %v644 = vlaneseq
        %v645 = vshrl.u32 %v644, 7
        %v646 = vsub.s32 0, %v645
        %v647 = vrot.slane %v642, %v646
        %v648 = vadd.f32 %v635, %v647
        %649 = vst [vmem:[%s231] sm:$0x1] %v648
        %s650 = sand.u32 %s139, 1
        %s651 = scalar_lea.sflag [#allocation4], %s650
        %s652 = sand.u32 %s139, 1
        %s653 = scalar_lea.vmem [#allocation3], %s652
        // Predicated region
        $region41: #{tpu_custom_call.1} parent=39 // pred_check
          %p654 = pneg %p149
        $region42: #{tpu_custom_call.1} parent=39 // pred_check_branch
          %656 = sbr.rel (%p654) target = $region44
        $region43: #{tpu_custom_call.1} parent=39 // pred_region
          %s658 = ssub.s32 16, 16
          %659 = vsyncadd %s651, %s658
          %s660 = smul.addr %s21, 16
          %s661 = scalar_lea.hbm %s5, %s660
          %s663 = sshll.u32 %s653, 4
          %s664 = int_to_ptr.vmem [resolvable:$true] %s663
          %666 = dma.vmem_to_hbm [thread:$0]  %s664, 16, %s661, %s651
        $region44: #{tpu_custom_call.1} parent=39 // pred_fallthru
          _
      $region40: #{tpu_custom_call.1} parent=5 // pred_fallthru
        _
      %p667 = scmp.le.s32.totalorder 2, %s16
      // Predicated region
      $region45: #{tpu_custom_call.1} parent=5 // pred_check
        %p668 = pneg %p667
      $region46: #{tpu_custom_call.1} parent=5 // pred_check_branch
        %670 = sbr.rel (%p668) target = $region48
      $region47: #{tpu_custom_call.1} parent=5 // pred_region
        %s671 = ssub.s32 %s16, 2
        // Predicated region
        $region49: #{tpu_custom_call.1} parent=47 // pred_check
          %p672 = pneg %p155
        $region50: #{tpu_custom_call.1} parent=47 // pred_check_branch
          %674 = sbr.rel (%p672) target = $region52
        $region51: #{tpu_custom_call.1} parent=47 // pred_region
          %s675 = sand.u32 %s140, 1
          %s676 = scalar_lea.sflag [#allocation4], %s675
          %s677 = sand.u32 %s140, 1
          %s678 = scalar_lea.vmem [#allocation3], %s677
          %679 = dma.done %s676, 16
        $region52: #{tpu_custom_call.1} parent=47 // pred_fallthru
          _
      $region48: #{tpu_custom_call.1} parent=5 // pred_fallthru
        _
    $region6: #{tpu_custom_call.1} parent=1 // loop_footer
      %s20 = sadd.s32 1, %s16
    $region7: #{tpu_custom_call.1} parent=1 // loop_footer_branch
      %15 = sbr.rel target = $region3
    $region8: #{tpu_custom_call.1} parent=1 // loop_exit
      _
    %680 = vsyncpa [#allocation4], 1
    %s681 = scalar_lea.sflag [#allocation4], 1
    %682 = vsyncpa %s681, 1

</llo_original>
